<compile_context>
chip_gen: v6e
topology: v6e:2x2x1
jax: 0.10.0
libtpu: 0.0.40
codegen_flags: <defaults>
</compile_context>

<pallas_src>
import jax
import jax.numpy as jnp
from jax import lax
from jax.experimental import pallas as pl
from jax.experimental.pallas import tpu as pltpu


def _critic_kernel(x_ref, w1_ref, b1_ref, w2_ref, b2_ref, w3_ref, b3_ref, o_ref):
    # One grid step processes `tm` flattened rows, in their natural row-major
    # layout (tm on sublanes, input features on lanes).
    x = x_ref[...]                                                   # (tm, in)

    # (hid, in) . (tm, in)^T -> (hid, tm): rows land on the lane axis, so the
    # second matmul, both tanh's and the output store are lane-dense without
    # any transpose of the large intermediates.
    h1 = jnp.tanh(
        lax.dot_general(
            w1_ref[...], x,
            dimension_numbers=(((1,), (1,)), ((), ())),
            preferred_element_type=jnp.float32,
        )
        + b1_ref[...]
    )                                                                # (hid, tm)
    h2 = jnp.tanh(
        jnp.dot(w2_ref[...], h1, preferred_element_type=jnp.float32) + b2_ref[...]
    )                                                                # (hid, tm)

    # Value head: VPU multiply + XLU sublane reduction (keeps the MXU free and
    # produces a lane-dense (1, tm) row -> unmasked full-width stores).
    v = jnp.sum(h2 * w3_ref[...], axis=0, keepdims=True) + b3_ref[...]
    o_ref[...] = v.astype(o_ref.dtype)


def _launch(x2d, params, *, tm, num_tiles, m_pad, input_size, hidden,
            vmem_limit, single_buffer_weights):
    w_kwargs = dict(pipeline_mode=pl.Buffered(1)) if single_buffer_weights else {}
    const = lambda i: (0, 0)
    in_specs = [
        pl.BlockSpec((tm, input_size), lambda i: (i, 0)),            # x row tile
        pl.BlockSpec((hidden, input_size), const, **w_kwargs),       # W1
        pl.BlockSpec((hidden, 1), const, **w_kwargs),                # b1 (col)
        pl.BlockSpec((hidden, hidden), const, **w_kwargs),           # W2
        pl.BlockSpec((hidden, 1), const, **w_kwargs),                # b2 (col)
        pl.BlockSpec((hidden, 1), const, **w_kwargs),                # w3 (col)
        pl.BlockSpec((1, 1), const, **w_kwargs),                     # b3
    ]
    return pl.pallas_call(
        _critic_kernel,
        out_shape=jax.ShapeDtypeStruct((1, m_pad), jnp.float32),
        grid_spec=pltpu.PrefetchScalarGridSpec(
            num_scalar_prefetch=0,
            grid=(num_tiles,),
            in_specs=in_specs,
            out_specs=pl.BlockSpec((1, tm), lambda i: (0, i)),       # lane-dense
        ),
        compiler_params=pltpu.CompilerParams(
            dimension_semantics=("parallel",),
            vmem_limit_bytes=vmem_limit,
        ),
    )(x2d, *params)


def critic_forward(x, params, *, tm=None):
    """x: (batch, N_o, input_size) float32 -> (batch, N_o) float32."""
    w1, b1, w2, b2, w3, b3 = params          # PyTorch layout (see init_params)
    batch, n_o, input_size = x.shape
    hidden = w1.shape[0]
    m = batch * n_o

    if tm is None:
        # Keep the two live (hidden, tm) f32 intermediates around <= 256 KiB:
        # 2 * hidden * tm * 4B <= 256 KiB  ->  tm <= 32768 / hidden.
        cap = max(256, min(2048, (32768 // max(hidden, 1)) // 128 * 128))
        tm = min(cap, ((m + 127) // 128) * 128)
    tm = max(128, ((tm + 127) // 128) * 128)

    # v7x shards "parallel" grid axes across its 2 TensorCores: prefer >= 2
    # tiles over one giant tile whenever m allows it (no-op on v5e/v6e).
    if m > 128 and pl.cdiv(m, tm) < 2:
        tm = max(128, ((((m + 1) // 2) + 127) // 128) * 128)

    num_tiles = pl.cdiv(m, tm)
    m_pad = num_tiles * tm

    x2d = x.reshape(m, input_size)
    if m_pad != m:
        # TODO(synk): for large m with m % tm != 0 (mainly a v5e HBM-traffic
        # win), overlap the last tile via element-offset index_maps instead of
        # materializing a zero-padded copy of x.
        x2d = jnp.pad(x2d, ((0, m_pad - m), (0, 0)))

    # VMEM budget from actual buffer sizes (worst case: double-buffered
    # weights), clamped gen-aware: <= 48 MiB keeps headroom under v7x's
    # 64 MiB physical VMEM; v5e/v6e (128 MiB) never need more here.
    f32 = 4
    vmem_needed = (
        2 * tm * input_size * f32                                    # x tile x2
        + 2 * tm * f32                                               # out x2
        + 2 * (hidden * input_size + hidden * hidden + 3 * hidden + 1) * f32
        + 2 * hidden * tm * f32                                      # h1/h2 live
    )
    vmem_limit = int(min(48 * 1024 * 1024, max(16 * 1024 * 1024, 2 * vmem_needed)))

    # TODO(synk): for hidden >= ~3-4K on v7x, add a trailing "arbitrary"
    # K-tiling grid axis over W2 (accumulate the pre-activation in VMEM
    # scratch) instead of keeping W2 fully resident.
    # TODO(synk): optionally hold W1/W2 resident in bf16 and cast the x tile
    # in-kernel (keeping f32 accumulation) if the bundle shows MXU/load slots,
    # not the EUP tanh's, as the binding unit.
    kwargs = dict(tm=tm, num_tiles=num_tiles, m_pad=m_pad,
                  input_size=input_size, hidden=hidden, vmem_limit=vmem_limit)
    try:
        out_row = _launch(x2d, params, single_buffer_weights=True, **kwargs)
    except Exception:
        # pipeline_mode=pl.Buffered(1) unsupported by this Pallas build; fall
        # back to default double-buffered resident weights (same numerics).
        out_row = _launch(x2d, params, single_buffer_weights=False, **kwargs)

    return out_row[0, :m].reshape(batch, n_o)


def init_params(key, input_size, hidden_size):
    """Deterministic synthetic init matching nn.Linear shapes.

    Stored in PyTorch orientation for the feature-major kernel:
      w1: (hidden, in), b1: (hidden, 1)
      w2: (hidden, hidden), b2: (hidden, 1)
      w3: (hidden, 1)  [= last layer weight (1, hidden) transposed], b3: (1, 1)
    """
    k1, k2, k3, k4, k5, k6 = jax.random.split(key, 6)
    scale1 = 1.0 / jnp.sqrt(input_size)
    scale2 = 1.0 / jnp.sqrt(hidden_size)
    w1 = jax.random.uniform(k1, (hidden_size, input_size), jnp.float32, -scale1, scale1)
    b1 = jax.random.uniform(k2, (hidden_size, 1), jnp.float32, -scale1, scale1)
    w2 = jax.random.uniform(k3, (hidden_size, hidden_size), jnp.float32, -scale2, scale2)
    b2 = jax.random.uniform(k4, (hidden_size, 1), jnp.float32, -scale2, scale2)
    w3 = jax.random.uniform(k5, (hidden_size, 1), jnp.float32, -scale2, scale2)
    b3 = jax.random.uniform(k6, (1, 1), jnp.float32, -scale2, scale2)
    return (w1, b1, w2, b2, w3, b3)


def critic_reference(x, params):
    """Pure-JAX reference of the PyTorch forward pass."""
    w1, b1, w2, b2, w3, b3 = params
    batch, n_o, input_size = x.shape
    h = x.reshape(-1, input_size)
    h = jnp.tanh(h @ w1.T + b1[:, 0])
    h = jnp.tanh(h @ w2.T + b2[:, 0])
    v = h @ w3 + b3[0]
    return v.reshape(batch, n_o)


if __name__ == "__main__":
    key = jax.random.PRNGKey(0)
    kx, kp = jax.random.split(key)

    batch, n_o, input_size, hidden_size = 2, 8, 32, 32
    x = jax.random.normal(kx, (batch, n_o, input_size), jnp.float32)
    params = init_params(kp, input_size, hidden_size)

    out = critic_forward(x, params)
    out = jax.block_until_ready(out)

    ref = critic_reference(x, params)
    assert out.shape == (batch, n_o)
    assert jnp.allclose(out, ref, atol=1e-5, rtol=1e-5)

    print("KERNEL_OK")
</pallas_src>

<mosaic_0001>
module attributes {stable_mosaic.version = 11 : i64} {
  func.func @_critic_kernel(%arg0: i32, %arg1: memref<128x32xf32, #tpu.memory_space<vmem>>, %arg2: memref<32x32xf32, #tpu.memory_space<vmem>>, %arg3: memref<32x1xf32, #tpu.memory_space<vmem>>, %arg4: memref<32x32xf32, #tpu.memory_space<vmem>>, %arg5: memref<32x1xf32, #tpu.memory_space<vmem>>, %arg6: memref<32x1xf32, #tpu.memory_space<vmem>>, %arg7: memref<1x1xf32, #tpu.memory_space<vmem>>, %arg8: memref<1x128xf32, #tpu.memory_space<vmem>>) attributes {dimension_semantics = [#tpu.dimension_semantics<parallel>], iteration_bounds = array<i64: 1>, scalar_prefetch = 0 : i64, scratch_operands = 0 : i64, tpu.core_type = #tpu.core_type<tc>, window_params = [{transform_indices = @transform_0, window_bounds = array<i64: 128, 32>}, {pipeline_mode = #tpu.pipeline_mode<synchronous>, transform_indices = @transform_1, window_bounds = array<i64: 32, 32>}, {pipeline_mode = #tpu.pipeline_mode<synchronous>, transform_indices = @transform_2, window_bounds = array<i64: 32, 1>}, {pipeline_mode = #tpu.pipeline_mode<synchronous>, transform_indices = @transform_3, window_bounds = array<i64: 32, 32>}, {pipeline_mode = #tpu.pipeline_mode<synchronous>, transform_indices = @transform_4, window_bounds = array<i64: 32, 1>}, {pipeline_mode = #tpu.pipeline_mode<synchronous>, transform_indices = @transform_5, window_bounds = array<i64: 32, 1>}, {pipeline_mode = #tpu.pipeline_mode<synchronous>, transform_indices = @transform_6, window_bounds = array<i64: 1, 1>}, {transform_indices = @transform_7, window_bounds = array<i64: 1, 128>}]} {
    %c0 = arith.constant 0 : index
    %c0_0 = arith.constant 0 : index
    %0 = vector.load %arg1[%c0, %c0_0] : memref<128x32xf32, #tpu.memory_space<vmem>>, vector<128x32xf32>
    %c0_1 = arith.constant 0 : index
    %c0_2 = arith.constant 0 : index
    %1 = vector.load %arg2[%c0_1, %c0_2] : memref<32x32xf32, #tpu.memory_space<vmem>>, vector<32x32xf32>
    %cst = arith.constant dense<0.000000e+00> : vector<32x128xf32>
    %2 = tpu.matmul %1, %0, %cst {dimension_numbers = #tpu.dot_dimension_numbers<[1], [1], [0], [0], [0, 0, 1, 0], [], []>} : vector<32x32xf32>, vector<128x32xf32>, vector<32x128xf32> -> vector<32x128xf32>
    %c0_3 = arith.constant 0 : index
    %c0_4 = arith.constant 0 : index
    %3 = vector.load %arg3[%c0_3, %c0_4] : memref<32x1xf32, #tpu.memory_space<vmem>>, vector<32x1xf32>
    %4 = vector.broadcast %3 : vector<32x1xf32> to vector<32x128xf32>
    %5 = arith.addf %2, %4 : vector<32x128xf32>
    %6 = math.tanh %5 : vector<32x128xf32>
    %c0_5 = arith.constant 0 : index
    %c0_6 = arith.constant 0 : index
    %7 = vector.load %arg4[%c0_5, %c0_6] : memref<32x32xf32, #tpu.memory_space<vmem>>, vector<32x32xf32>
    %cst_7 = arith.constant dense<0.000000e+00> : vector<32x128xf32>
    %8 = tpu.matmul %7, %6, %cst_7 {dimension_numbers = #tpu.dot_dimension_numbers<[1], [0], [0], [1], [0, 0, 1, 1], [], []>} : vector<32x32xf32>, vector<32x128xf32>, vector<32x128xf32> -> vector<32x128xf32>
    %c0_8 = arith.constant 0 : index
    %c0_9 = arith.constant 0 : index
    %9 = vector.load %arg5[%c0_8, %c0_9] : memref<32x1xf32, #tpu.memory_space<vmem>>, vector<32x1xf32>
    %10 = vector.broadcast %9 : vector<32x1xf32> to vector<32x128xf32>
    %11 = arith.addf %8, %10 : vector<32x128xf32>
    %12 = math.tanh %11 : vector<32x128xf32>
    %c0_10 = arith.constant 0 : index
    %c0_11 = arith.constant 0 : index
    %13 = vector.load %arg6[%c0_10, %c0_11] : memref<32x1xf32, #tpu.memory_space<vmem>>, vector<32x1xf32>
    %14 = vector.broadcast %13 : vector<32x1xf32> to vector<32x128xf32>
    %15 = arith.mulf %12, %14 : vector<32x128xf32>
    %cst_12 = arith.constant dense<0.000000e+00> : vector<128xf32>
    %16 = vector.multi_reduction <add>, %15, %cst_12 [0] : vector<32x128xf32> to vector<128xf32>
    %17 = vector.shape_cast %16 : vector<128xf32> to vector<1x128xf32>
    %c0_13 = arith.constant 0 : index
    %c0_14 = arith.constant 0 : index
    %18 = vector.load %arg7[%c0_13, %c0_14] : memref<1x1xf32, #tpu.memory_space<vmem>>, vector<1x1xf32>
    %19 = vector.broadcast %18 : vector<1x1xf32> to vector<1x128xf32>
    %20 = arith.addf %17, %19 : vector<1x128xf32>
    %c0_15 = arith.constant 0 : index
    %c0_16 = arith.constant 0 : index
    %21 = vector.load %arg8[%c0_15, %c0_16] : memref<1x128xf32, #tpu.memory_space<vmem>>, vector<1x128xf32>
    tpu.vector_store %arg8[%c0_15, %c0_16], %20 {strides = array<i32>} : memref<1x128xf32, #tpu.memory_space<vmem>>, vector<1x128xf32>,
    return
  }
  func.func @transform_0(%arg0: i32) -> (i32, i32) {
    %c0_i32 = arith.constant 0 : i32
    %c0_i32_0 = arith.constant 0 : i32
    return %arg0, %c0_i32 : i32, i32
  }
  func.func @transform_1(%arg0: i32) -> (i32, i32) {
    %c0_i32 = arith.constant 0 : i32
    %c0_i32_0 = arith.constant 0 : i32
    %c0_i32_1 = arith.constant 0 : i32
    return %c0_i32, %c0_i32_0 : i32, i32
  }
  func.func @transform_2(%arg0: i32) -> (i32, i32) {
    %c0_i32 = arith.constant 0 : i32
    %c0_i32_0 = arith.constant 0 : i32
    %c0_i32_1 = arith.constant 0 : i32
    return %c0_i32, %c0_i32_0 : i32, i32
  }
  func.func @transform_3(%arg0: i32) -> (i32, i32) {
    %c0_i32 = arith.constant 0 : i32
    %c0_i32_0 = arith.constant 0 : i32
    %c0_i32_1 = arith.constant 0 : i32
    return %c0_i32, %c0_i32_0 : i32, i32
  }
  func.func @transform_4(%arg0: i32) -> (i32, i32) {
    %c0_i32 = arith.constant 0 : i32
    %c0_i32_0 = arith.constant 0 : i32
    %c0_i32_1 = arith.constant 0 : i32
    return %c0_i32, %c0_i32_0 : i32, i32
  }
  func.func @transform_5(%arg0: i32) -> (i32, i32) {
    %c0_i32 = arith.constant 0 : i32
    %c0_i32_0 = arith.constant 0 : i32
    %c0_i32_1 = arith.constant 0 : i32
    return %c0_i32, %c0_i32_0 : i32, i32
  }
  func.func @transform_6(%arg0: i32) -> (i32, i32) {
    %c0_i32 = arith.constant 0 : i32
    %c0_i32_0 = arith.constant 0 : i32
    %c0_i32_1 = arith.constant 0 : i32
    return %c0_i32, %c0_i32_0 : i32, i32
  }
  func.func @transform_7(%arg0: i32) -> (i32, i32) {
    %c0_i32 = arith.constant 0 : i32
    %c0_i32_0 = arith.constant 0 : i32
    return %c0_i32, %arg0 : i32, i32
  }
}

module attributes {stable_mosaic.version = 11 : i64} {
  func.func @_critic_kernel(%arg0: i32, %arg1: memref<128x32xf32, #tpu.memory_space<vmem>>, %arg2: memref<32x32xf32, #tpu.memory_space<vmem>>, %arg3: memref<32x1xf32, #tpu.memory_space<vmem>>, %arg4: memref<32x32xf32, #tpu.memory_space<vmem>>, %arg5: memref<32x1xf32, #tpu.memory_space<vmem>>, %arg6: memref<32x1xf32, #tpu.memory_space<vmem>>, %arg7: memref<1x1xf32, #tpu.memory_space<vmem>>, %arg8: memref<1x128xf32, #tpu.memory_space<vmem>>) attributes {dimension_semantics = [#tpu.dimension_semantics<parallel>], iteration_bounds = array<i64: 1>, scalar_prefetch = 0 : i64, scratch_operands = 0 : i64, tpu.core_type = #tpu.core_type<tc>, window_params = [{transform_indices = @transform_0, window_bounds = array<i64: 128, 32>}, {pipeline_mode = #tpu.pipeline_mode<synchronous>, transform_indices = @transform_1, window_bounds = array<i64: 32, 32>}, {pipeline_mode = #tpu.pipeline_mode<synchronous>, transform_indices = @transform_2, window_bounds = array<i64: 32, 1>}, {pipeline_mode = #tpu.pipeline_mode<synchronous>, transform_indices = @transform_3, window_bounds = array<i64: 32, 32>}, {pipeline_mode = #tpu.pipeline_mode<synchronous>, transform_indices = @transform_4, window_bounds = array<i64: 32, 1>}, {pipeline_mode = #tpu.pipeline_mode<synchronous>, transform_indices = @transform_5, window_bounds = array<i64: 32, 1>}, {pipeline_mode = #tpu.pipeline_mode<synchronous>, transform_indices = @transform_6, window_bounds = array<i64: 1, 1>}, {transform_indices = @transform_7, window_bounds = array<i64: 1, 128>}]} {
    %c0 = arith.constant 0 : index
    %c0_0 = arith.constant 0 : index
    %0 = vector.load %arg1[%c0, %c0_0] : memref<128x32xf32, #tpu.memory_space<vmem>>, vector<128x32xf32>
    %c0_1 = arith.constant 0 : index
    %c0_2 = arith.constant 0 : index
    %1 = vector.load %arg2[%c0_1, %c0_2] : memref<32x32xf32, #tpu.memory_space<vmem>>, vector<32x32xf32>
    %cst = arith.constant dense<0.000000e+00> : vector<32x128xf32>
    %2 = tpu.matmul %1, %0, %cst {dimension_numbers = #tpu.dot_dimension_numbers<[1], [1], [0], [0], [0, 0, 1, 0], [], []>} : vector<32x32xf32>, vector<128x32xf32>, vector<32x128xf32> -> vector<32x128xf32>
    %c0_3 = arith.constant 0 : index
    %c0_4 = arith.constant 0 : index
    %3 = vector.load %arg3[%c0_3, %c0_4] : memref<32x1xf32, #tpu.memory_space<vmem>>, vector<32x1xf32>
    %4 = vector.broadcast %3 : vector<32x1xf32> to vector<32x128xf32>
    %5 = arith.addf %2, %4 : vector<32x128xf32>
    %6 = math.tanh %5 : vector<32x128xf32>
    %c0_5 = arith.constant 0 : index
    %c0_6 = arith.constant 0 : index
    %7 = vector.load %arg4[%c0_5, %c0_6] : memref<32x32xf32, #tpu.memory_space<vmem>>, vector<32x32xf32>
    %cst_7 = arith.constant dense<0.000000e+00> : vector<32x128xf32>
    %8 = tpu.matmul %7, %6, %cst_7 {dimension_numbers = #tpu.dot_dimension_numbers<[1], [0], [0], [1], [0, 0, 1, 1], [], []>} : vector<32x32xf32>, vector<32x128xf32>, vector<32x128xf32> -> vector<32x128xf32>
    %c0_8 = arith.constant 0 : index
    %c0_9 = arith.constant 0 : index
    %9 = vector.load %arg5[%c0_8, %c0_9] : memref<32x1xf32, #tpu.memory_space<vmem>>, vector<32x1xf32>
    %10 = vector.broadcast %9 : vector<32x1xf32> to vector<32x128xf32>
    %11 = arith.addf %8, %10 : vector<32x128xf32>
    %12 = math.tanh %11 : vector<32x128xf32>
    %c0_10 = arith.constant 0 : index
    %c0_11 = arith.constant 0 : index
    %13 = vector.load %arg6[%c0_10, %c0_11] : memref<32x1xf32, #tpu.memory_space<vmem>>, vector<32x1xf32>
    %14 = vector.broadcast %13 : vector<32x1xf32> to vector<32x128xf32>
    %15 = arith.mulf %12, %14 : vector<32x128xf32>
    %cst_12 = arith.constant dense<0.000000e+00> : vector<128xf32>
    %16 = vector.multi_reduction <add>, %15, %cst_12 [0] : vector<32x128xf32> to vector<128xf32>
    %17 = vector.shape_cast %16 : vector<128xf32> to vector<1x128xf32>
    %c0_13 = arith.constant 0 : index
    %c0_14 = arith.constant 0 : index
    %18 = vector.load %arg7[%c0_13, %c0_14] : memref<1x1xf32, #tpu.memory_space<vmem>>, vector<1x1xf32>
    %19 = vector.broadcast %18 : vector<1x1xf32> to vector<1x128xf32>
    %20 = arith.addf %17, %19 : vector<1x128xf32>
    %c0_15 = arith.constant 0 : index
    %c0_16 = arith.constant 0 : index
    %21 = vector.load %arg8[%c0_15, %c0_16] : memref<1x128xf32, #tpu.memory_space<vmem>>, vector<1x128xf32>
    tpu.vector_store %arg8[%c0_15, %c0_16], %20 {strides = array<i32>} : memref<1x128xf32, #tpu.memory_space<vmem>>, vector<1x128xf32>,
    return
  }
  func.func @transform_0(%arg0: i32) -> (i32, i32) {
    %c0_i32 = arith.constant 0 : i32
    %c0_i32_0 = arith.constant 0 : i32
    return %arg0, %c0_i32 : i32, i32
  }
  func.func @transform_1(%arg0: i32) -> (i32, i32) {
    %c0_i32 = arith.constant 0 : i32
    %c0_i32_0 = arith.constant 0 : i32
    %c0_i32_1 = arith.constant 0 : i32
    return %c0_i32, %c0_i32_0 : i32, i32
  }
  func.func @transform_2(%arg0: i32) -> (i32, i32) {
    %c0_i32 = arith.constant 0 : i32
    %c0_i32_0 = arith.constant 0 : i32
    %c0_i32_1 = arith.constant 0 : i32
    return %c0_i32, %c0_i32_0 : i32, i32
  }
  func.func @transform_3(%arg0: i32) -> (i32, i32) {
    %c0_i32 = arith.constant 0 : i32
    %c0_i32_0 = arith.constant 0 : i32
    %c0_i32_1 = arith.constant 0 : i32
    return %c0_i32, %c0_i32_0 : i32, i32
  }
  func.func @transform_4(%arg0: i32) -> (i32, i32) {
    %c0_i32 = arith.constant 0 : i32
    %c0_i32_0 = arith.constant 0 : i32
    %c0_i32_1 = arith.constant 0 : i32
    return %c0_i32, %c0_i32_0 : i32, i32
  }
  func.func @transform_5(%arg0: i32) -> (i32, i32) {
    %c0_i32 = arith.constant 0 : i32
    %c0_i32_0 = arith.constant 0 : i32
    %c0_i32_1 = arith.constant 0 : i32
    return %c0_i32, %c0_i32_0 : i32, i32
  }
  func.func @transform_6(%arg0: i32) -> (i32, i32) {
    %c0_i32 = arith.constant 0 : i32
    %c0_i32_0 = arith.constant 0 : i32
    %c0_i32_1 = arith.constant 0 : i32
    return %c0_i32, %c0_i32_0 : i32, i32
  }
  func.func @transform_7(%arg0: i32) -> (i32, i32) {
    %c0_i32 = arith.constant 0 : i32
    %c0_i32_0 = arith.constant 0 : i32
    return %c0_i32, %arg0 : i32, i32
  }
}

</mosaic_0001>

<llo_original>
// kernel: tpu_custom_call.1
$region0: #{tpu_custom_call.1}
  #allocation0 [shape = 'u32[]', space=smem, size = 0x4, offset = 0x4, fixed_abs, tag = 'smem constant byte address 0x4 - core index']
  #allocation1 [shape = 'u32[144,128]{1,0:T(1,128)}', space=vmem, size = 0x12000, scoped, tag = 'internal scratch']
  #allocation2 [shape = 'f32[1,1]{1,0:T(1,128)S(1)}', space=vmem, size = 0x200, scoped, tag = 'scoped memory for tpu_custom_call.1']
  %s0 = inlined_call_operand.vmem [shape: f32[128,32], index: 0, kind: input, shape index: {}]
  %s1 = inlined_call_operand.vmem [shape: f32[32,32], index: 1, kind: input, shape index: {}]
  %s2 = inlined_call_operand.vmem [shape: f32[32,1], index: 2, kind: input, shape index: {}]
  %s3 = inlined_call_operand.vmem [shape: f32[32,32], index: 3, kind: input, shape index: {}]
  %s4 = inlined_call_operand.vmem [shape: f32[32,1], index: 4, kind: input, shape index: {}]
  %s5 = inlined_call_operand.vmem [shape: f32[32,1], index: 5, kind: input, shape index: {}]
  %s6 = inlined_call_operand.<no memory space> [shape: f32[1,1], index: 6, kind: input, shape index: {}]
  %s7 = inlined_call_operand.hbm [shape: f32[1,128], index: 7, kind: output, shape index: {}]
  %s8 = sld [smem:[#allocation0]]
  $region38: #{tpu_custom_call.1} parent=0
    _
  %s10 = ssub.s32 1, %s8
  %s11 = scalar_select 0, %s10, %s8
  %v12 = vstv %s6
  %13 = vst [vmem:[#allocation2] sm:$0x1] %v12
  $region1: #{tpu_custom_call.1} parent=0
    #allocation3 [shape = 'u8[512]{0}', space=vmem, size = 0x400, scoped, tag = 'output window, operand 0, single buffered']
    #allocation4 [shape = 's32[1]{0}', space=sflag, size = 0x4, scoped, tag = 'scoped memory for tpu_custom_call.1']
    %14 = vsyncpa [#allocation4], 0
    // Predicated region
    $region2: #{tpu_custom_call.1} parent=1 // pred_check
      _
    $region3: #{tpu_custom_call.1} parent=1 // pred_check_branch
      %16 = sbr.rel (0) target = $region5
    $region4: #{tpu_custom_call.1} parent=1 // pred_region
      _
    $region5: #{tpu_custom_call.1} parent=1 // pred_fallthru
      _
    // Predicated region
    $region6: #{tpu_custom_call.1} parent=1 // pred_check
      _
    $region7: #{tpu_custom_call.1} parent=1 // pred_check_branch
      %18 = sbr.rel (0) target = $region9
    $region8: #{tpu_custom_call.1} parent=1 // pred_region
      _
    $region9: #{tpu_custom_call.1} parent=1 // pred_fallthru
      _
    // Predicated region
    $region10: #{tpu_custom_call.1} parent=1 // pred_check
      _
    $region11: #{tpu_custom_call.1} parent=1 // pred_check_branch
      %20 = sbr.rel (0) target = $region13
    $region12: #{tpu_custom_call.1} parent=1 // pred_region
      _
    $region13: #{tpu_custom_call.1} parent=1 // pred_fallthru
      _
    // Predicated region
    $region14: #{tpu_custom_call.1} parent=1 // pred_check
      _
    $region15: #{tpu_custom_call.1} parent=1 // pred_check_branch
      %22 = sbr.rel (0) target = $region17
    $region16: #{tpu_custom_call.1} parent=1 // pred_region
      _
    $region17: #{tpu_custom_call.1} parent=1 // pred_fallthru
      _
    // Predicated region
    $region18: #{tpu_custom_call.1} parent=1 // pred_check
      _
    $region19: #{tpu_custom_call.1} parent=1 // pred_check_branch
      %24 = sbr.rel (0) target = $region21
    $region20: #{tpu_custom_call.1} parent=1 // pred_region
      _
    $region21: #{tpu_custom_call.1} parent=1 // pred_fallthru
      _
    // Predicated region
    $region22: #{tpu_custom_call.1} parent=1 // pred_check
      _
    $region23: #{tpu_custom_call.1} parent=1 // pred_check_branch
      %26 = sbr.rel (0) target = $region25
    $region24: #{tpu_custom_call.1} parent=1 // pred_region
      _
    $region25: #{tpu_custom_call.1} parent=1 // pred_fallthru
      _
    // Predicated region
    $region26: #{tpu_custom_call.1} parent=1 // pred_check
      _
    $region27: #{tpu_custom_call.1} parent=1 // pred_check_branch
      %28 = sbr.rel (0) target = $region29
    $region28: #{tpu_custom_call.1} parent=1 // pred_region
      _
    $region29: #{tpu_custom_call.1} parent=1 // pred_fallthru
      _
    %v29 = vld [vmem:[%s0] sm:$0xff]
    %v30 = vld [vmem:[%s0 + $0x8] sm:$0xff]
    %v31 = vld [vmem:[%s0 + $0x10] sm:$0xff]
    %v32 = vld [vmem:[%s0 + $0x18] sm:$0xff]
    %v33 = vld [vmem:[%s0 + $0x20] sm:$0xff]
    %v34 = vld [vmem:[%s0 + $0x28] sm:$0xff]
    %v35 = vld [vmem:[%s0 + $0x30] sm:$0xff]
    %v36 = vld [vmem:[%s0 + $0x38] sm:$0xff]
    %v37 = vld [vmem:[%s0 + $0x40] sm:$0xff]
    %v38 = vld [vmem:[%s0 + $0x48] sm:$0xff]
    %v39 = vld [vmem:[%s0 + $0x50] sm:$0xff]
    %v40 = vld [vmem:[%s0 + $0x58] sm:$0xff]
    %v41 = vld [vmem:[%s0 + $0x60] sm:$0xff]
    %v42 = vld [vmem:[%s0 + $0x68] sm:$0xff]
    %v43 = vld [vmem:[%s0 + $0x70] sm:$0xff]
    %v44 = vld [vmem:[%s0 + $0x78] sm:$0xff]
    %v45 = vld [vmem:[%s1] sm:$0xff]
    %v46 = vld [vmem:[%s1 + $0x8] sm:$0xff]
    %v47 = vld [vmem:[%s1 + $0x10] sm:$0xff]
    %v48 = vld [vmem:[%s1 + $0x18] sm:$0xff]
    %v49 = vld [vmem:[%s2] sm:$0xff]
    %v50 = vld [vmem:[%s2 + $0x8] sm:$0xff]
    %v51 = vld [vmem:[%s2 + $0x10] sm:$0xff]
    %v52 = vld [vmem:[%s2 + $0x18] sm:$0xff]
    %54 = vset.pattern.permute.xlu0 0
    %55 = vperm.xlu0 %54, %v49
    %v56 = vpop.permute.xlu0 %55
    %59 = vset.pattern.permute.xlu0 0
    %60 = vperm.xlu0 %59, %v50
    %v61 = vpop.permute.xlu0 %60
    %64 = vset.pattern.permute.xlu0 0
    %65 = vperm.xlu0 %64, %v51
    %v66 = vpop.permute.xlu0 %65
    %69 = vset.pattern.permute.xlu0 0
    %70 = vperm.xlu0 %69, %v52
    %v71 = vpop.permute.xlu0 %70
    %vm73 = vcmask 261120
    %v75 = vsel %vm73, %v45, 0
    %v78 = vsel %vm73, %v46, 0
    %v81 = vsel %vm73, %v47, 0
    %v84 = vsel %vm73, %v48, 0
    %v87 = vsel %vm73, %v29, 0
    %v90 = vsel %vm73, %v30, 0
    %v93 = vsel %vm73, %v31, 0
    %v96 = vsel %vm73, %v32, 0
    %v99 = vsel %vm73, %v33, 0
    %v102 = vsel %vm73, %v34, 0
    %v105 = vsel %vm73, %v35, 0
    %v108 = vsel %vm73, %v36, 0
    %v111 = vsel %vm73, %v37, 0
    %v114 = vsel %vm73, %v38, 0
    %v117 = vsel %vm73, %v39, 0
    %v120 = vsel %vm73, %v40, 0
    %v123 = vsel %vm73, %v41, 0
    %v126 = vsel %vm73, %v42, 0
    %v129 = vsel %vm73, %v43, 0
    %v132 = vsel %vm73, %v44, 0
    %134 = vmatprep.subr.mxu0 0.0
    %135 = vmatpush1.xpose.msra.mxu0 %v132
    %136 = vmatprep.subr.mxu0 0.0
    %137 = vmatpush1.xpose.msra.mxu0 %v129
    %138 = vmatprep.subr.mxu0 0.0
    %139 = vmatpush1.xpose.msra.mxu0 %v126
    %140 = vmatprep.subr.mxu0 0.0
    %141 = vmatpush1.xpose.msra.mxu0 %v123
    %142 = vmatprep.subr.mxu0 0.0
    %143 = vmatpush1.xpose.msra.mxu0 %v120
    %144 = vmatprep.subr.mxu0 0.0
    %145 = vmatpush1.xpose.msra.mxu0 %v117
    %146 = vmatprep.subr.mxu0 0.0
    %147 = vmatpush1.xpose.msra.mxu0 %v114
    %148 = vmatprep.subr.mxu0 0.0
    %149 = vmatpush1.xpose.msra.mxu0 %v111
    %150 = vmatprep.subr.mxu0 0.0
    %151 = vmatpush1.xpose.msra.mxu0 %v108
    %152 = vmatprep.subr.mxu0 0.0
    %153 = vmatpush1.xpose.msra.mxu0 %v105
    %154 = vmatprep.subr.mxu0 0.0
    %155 = vmatpush1.xpose.msra.mxu0 %v102
    %156 = vmatprep.subr.mxu0 0.0
    %157 = vmatpush1.xpose.msra.mxu0 %v99
    %158 = vmatprep.subr.mxu0 0.0
    %159 = vmatpush1.xpose.msra.mxu0 %v96
    %160 = vmatprep.subr.mxu0 0.0
    %161 = vmatpush1.xpose.msra.mxu0 %v93
    %162 = vmatprep.subr.mxu0 0.0
    %163 = vmatpush1.xpose.msra.mxu0 %v90
    %164 = vmatprep.subr.mxu0 0.0
    %165 = vmatpush1.xpose.msra.mxu0 %v87
    %166 = vmatprep.subr.mxu0 0.0
    %167 = vmatpush2.xpose.msra.mxu0 0.0
    %168 = vmatprep.subr.mxu0 0.0
    %169 = vmatpush2.xpose.msra.mxu0 0.0
    %170 = vmatprep.subr.mxu0 0.0
    %171 = vmatpush2.xpose.msra.mxu0 0.0
    %172 = vmatprep.subr.mxu0 0.0
    %173 = vmatpush2.xpose.msra.mxu0 0.0
    %174 = vmatprep.subr.mxu0 0.0
    %175 = vmatpush2.xpose.msra.mxu0 0.0
    %176 = vmatprep.subr.mxu0 0.0
    %177 = vmatpush2.xpose.msra.mxu0 0.0
    %178 = vmatprep.subr.mxu0 0.0
    %179 = vmatpush2.xpose.msra.mxu0 0.0
    %180 = vmatprep.subr.mxu0 0.0
    %181 = vmatpush2.xpose.msra.mxu0 0.0
    %182 = vmatprep.subr.mxu0 0.0
    %183 = vmatpush2.xpose.msra.mxu0 0.0
    %184 = vmatprep.subr.mxu0 0.0
    %185 = vmatpush2.xpose.msra.mxu0 0.0
    %186 = vmatprep.subr.mxu0 0.0
    %187 = vmatpush2.xpose.msra.mxu0 0.0
    %188 = vmatprep.subr.mxu0 0.0
    %189 = vmatpush2.xpose.msra.mxu0 0.0
    %190 = vmatprep.subr.mxu0 0.0
    %191 = vmatpush2.xpose.msra.mxu0 0.0
    %192 = vmatprep.subr.mxu0 0.0
    %193 = vmatpush2.xpose.msra.mxu0 0.0
    %194 = vmatprep.subr.mxu0 0.0
    %195 = vmatpush2.xpose.msra.mxu0 0.0
    %196 = vmatprep.subr.mxu0 0.0
    %197 = vmatpush2.xpose.msra.mxu0 0.0
    %198 = vmatprep.mubr.f32.mxu0 0.0
    %199 = vmatmul.mubr.f32.gmra.mxu0 %v75
    %v200 = vpop.f32.mrf.mxu0
    %v201 = vadd.f32 %v56, %v200
    %v202 = vpop.f32.mrf.mxu0
    %203 = vmatprep.mubr.f32.mxu0 0.0
    %204 = vmatmul.mubr.f32.gmra.mxu0 %v78
    %v205 = vpop.f32.mrf.mxu0
    %v206 = vadd.f32 %v61, %v205
    %v207 = vpop.f32.mrf.mxu0
    %208 = vmatprep.mubr.f32.mxu0 0.0
    %209 = vmatmul.mubr.f32.gmra.mxu0 %v81
    %v210 = vpop.f32.mrf.mxu0
    %v211 = vadd.f32 %v66, %v210
    %v212 = vpop.f32.mrf.mxu0
    %213 = vmatprep.mubr.f32.mxu0 0.0
    %214 = vmatmul.mubr.f32.gmra.mxu0 %v84
    %v215 = vpop.f32.mrf.mxu0
    %v216 = vadd.f32 %v71, %v215
    %v217 = vpop.f32.mrf.mxu0
    %218 = vdwg.mxu0
    %v219 = vtanh.pop %v201
    %v220 = vtanh.pop %v206
    %v221 = vtanh.pop %v211
    %v222 = vtanh.pop %v216
    %v223 = vld [vmem:[%s3] sm:$0xff]
    %v224 = vld [vmem:[%s3 + $0x8] sm:$0xff]
    %v225 = vld [vmem:[%s3 + $0x10] sm:$0xff]
    %v226 = vld [vmem:[%s3 + $0x18] sm:$0xff]
    %v227 = vld [vmem:[%s4] sm:$0xff]
    %v228 = vld [vmem:[%s4 + $0x8] sm:$0xff]
    %v229 = vld [vmem:[%s4 + $0x10] sm:$0xff]
    %v230 = vld [vmem:[%s4 + $0x18] sm:$0xff]
    %232 = vset.pattern.permute.xlu0 0
    %233 = vperm.xlu0 %232, %v227
    %v234 = vpop.permute.xlu0 %233
    %237 = vset.pattern.permute.xlu0 0
    %238 = vperm.xlu0 %237, %v228
    %v239 = vpop.permute.xlu0 %238
    %242 = vset.pattern.permute.xlu0 0
    %243 = vperm.xlu0 %242, %v229
    %v244 = vpop.permute.xlu0 %243
    %247 = vset.pattern.permute.xlu0 0
    %248 = vperm.xlu0 %247, %v230
    %v249 = vpop.permute.xlu0 %248
    %v252 = vsel %vm73, %v223, 0
    %v255 = vsel %vm73, %v224, 0
    %v258 = vsel %vm73, %v225, 0
    %v261 = vsel %vm73, %v226, 0
    %263 = vmatprep.subr.mxu0 0.0
    %264 = vmatpush1.msra.mxu0 0.0
    %265 = vmatprep.subr.mxu0 0.0
    %266 = vmatpush1.msra.mxu0 0.0
    %267 = vmatprep.subr.mxu0 0.0
    %268 = vmatpush1.msra.mxu0 0.0
    %269 = vmatprep.subr.mxu0 0.0
    %270 = vmatpush1.msra.mxu0 0.0
    %271 = vmatprep.subr.mxu0 0.0
    %272 = vmatpush1.msra.mxu0 0.0
    %273 = vmatprep.subr.mxu0 0.0
    %274 = vmatpush1.msra.mxu0 0.0
    %275 = vmatprep.subr.mxu0 0.0
    %276 = vmatpush1.msra.mxu0 0.0
    %277 = vmatprep.subr.mxu0 0.0
    %278 = vmatpush1.msra.mxu0 0.0
    %279 = vmatprep.subr.mxu0 0.0
    %280 = vmatpush1.msra.mxu0 0.0
    %281 = vmatprep.subr.mxu0 0.0
    %282 = vmatpush1.msra.mxu0 0.0
    %283 = vmatprep.subr.mxu0 0.0
    %284 = vmatpush1.msra.mxu0 0.0
    %285 = vmatprep.subr.mxu0 0.0
    %286 = vmatpush1.msra.mxu0 0.0
    %287 = vmatprep.subr.mxu0 0.0
    %288 = vmatpush1.msra.mxu0 %v222
    %289 = vmatprep.subr.mxu0 0.0
    %290 = vmatpush1.msra.mxu0 %v221
    %291 = vmatprep.subr.mxu0 0.0
    %292 = vmatpush1.msra.mxu0 %v220
    %293 = vmatprep.subr.mxu0 0.0
    %294 = vmatpush1.msra.mxu0 %v219
    %295 = vmatprep.subr.mxu0 0.0
    %296 = vmatpush2.msra.mxu0 0.0
    %297 = vmatprep.subr.mxu0 0.0
    %298 = vmatpush2.msra.mxu0 0.0
    %299 = vmatprep.subr.mxu0 0.0
    %300 = vmatpush2.msra.mxu0 0.0
    %301 = vmatprep.subr.mxu0 0.0
    %302 = vmatpush2.msra.mxu0 0.0
    %303 = vmatprep.subr.mxu0 0.0
    %304 = vmatpush2.msra.mxu0 0.0
    %305 = vmatprep.subr.mxu0 0.0
    %306 = vmatpush2.msra.mxu0 0.0
    %307 = vmatprep.subr.mxu0 0.0
    %308 = vmatpush2.msra.mxu0 0.0
    %309 = vmatprep.subr.mxu0 0.0
    %310 = vmatpush2.msra.mxu0 0.0
    %311 = vmatprep.subr.mxu0 0.0
    %312 = vmatpush2.msra.mxu0 0.0
    %313 = vmatprep.subr.mxu0 0.0
    %314 = vmatpush2.msra.mxu0 0.0
    %315 = vmatprep.subr.mxu0 0.0
    %316 = vmatpush2.msra.mxu0 0.0
    %317 = vmatprep.subr.mxu0 0.0
    %318 = vmatpush2.msra.mxu0 0.0
    %319 = vmatprep.subr.mxu0 0.0
    %320 = vmatpush2.msra.mxu0 0.0
    %321 = vmatprep.subr.mxu0 0.0
    %322 = vmatpush2.msra.mxu0 0.0
    %323 = vmatprep.subr.mxu0 0.0
    %324 = vmatpush2.msra.mxu0 0.0
    %325 = vmatprep.subr.mxu0 0.0
    %326 = vmatpush2.msra.mxu0 0.0
    %327 = vmatprep.mubr.f32.mxu0 0.0
    %328 = vmatmul.mubr.f32.gmra.mxu0 %v252
    %v329 = vpop.f32.mrf.mxu0
    %v330 = vadd.f32 %v234, %v329
    %v331 = vpop.f32.mrf.mxu0
    %332 = vmatprep.mubr.f32.mxu0 0.0
    %333 = vmatmul.mubr.f32.gmra.mxu0 %v255
    %v334 = vpop.f32.mrf.mxu0
    %v335 = vadd.f32 %v239, %v334
    %v336 = vpop.f32.mrf.mxu0
    %337 = vmatprep.mubr.f32.mxu0 0.0
    %338 = vmatmul.mubr.f32.gmra.mxu0 %v258
    %v339 = vpop.f32.mrf.mxu0
    %v340 = vadd.f32 %v244, %v339
    %v341 = vpop.f32.mrf.mxu0
    %342 = vmatprep.mubr.f32.mxu0 0.0
    %343 = vmatmul.mubr.f32.gmra.mxu0 %v261
    %v344 = vpop.f32.mrf.mxu0
    %v345 = vadd.f32 %v249, %v344
    %v346 = vpop.f32.mrf.mxu0
    %347 = vdwg.mxu0
    %v348 = vtanh.pop %v330
    %v349 = vtanh.pop %v335
    %v350 = vtanh.pop %v340
    %v351 = vtanh.pop %v345
    %v352 = vld [vmem:[%s5] sm:$0xff]
    %v353 = vld [vmem:[%s5 + $0x8] sm:$0xff]
    %v354 = vld [vmem:[%s5 + $0x10] sm:$0xff]
    %v355 = vld [vmem:[%s5 + $0x18] sm:$0xff]
    %357 = vset.pattern.permute.xlu0 0
    %358 = vperm.xlu0 %357, %v352
    %v359 = vpop.permute.xlu0 %358
    %362 = vset.pattern.permute.xlu0 0
    %363 = vperm.xlu0 %362, %v353
    %v364 = vpop.permute.xlu0 %363
    %367 = vset.pattern.permute.xlu0 0
    %368 = vperm.xlu0 %367, %v354
    %v369 = vpop.permute.xlu0 %368
    %372 = vset.pattern.permute.xlu0 0
    %373 = vperm.xlu0 %372, %v355
    %v374 = vpop.permute.xlu0 %373
    %v376 = vmul.f32 %v348, %v359
    %v377 = vmul.f32 %v349, %v364
    %v378 = vmul.f32 %v350, %v369
    %v379 = vmul.f32 %v351, %v374
    %v380 = vadd.f32 %v376, %v377
    %v381 = vadd.f32 %v380, %v378
    %v382 = vadd.f32 %v381, %v379
    %v383 = vrot.slane %v382, 4
    %v384 = vadd.f32 %v382, %v383
    %v385 = vrot.slane %v384, 2
    %v386 = vadd.f32 %v384, %v385
    %v387 = vrot.slane %v386, 1
    %v388 = vadd.f32 %v386, %v387
    %v389 = vld [vmem:[#allocation2] sm:$0x1]
    %391 = vset.pattern.permute.xlu0 0
    %392 = vperm.xlu0 %391, %v389
    %v393 = vpop.permute.xlu0 %392
    %v395 = vlaneseq
    %v396 = vshrl.u32 %v395, 7
    %v397 = vsub.s32 0, %v396
    %v398 = vrot.slane %v393, %v397
    %v399 = vadd.f32 %v388, %v398
    %400 = vst [vmem:[#allocation3] sm:$0x1] %v399
    // Predicated region
    $region30: #{tpu_custom_call.1} parent=1 // pred_check
      _
    $region31: #{tpu_custom_call.1} parent=1 // pred_check_branch
      %402 = sbr.rel (0) target = $region33
    $region32: #{tpu_custom_call.1} parent=1 // pred_region
      %s404 = ssub.s32 16, 16
      %405 = vsyncadd [#allocation4], %s404
      %s407 = sshll.u32 [#allocation3], 4
      %s408 = int_to_ptr.vmem [resolvable:$true] %s407
      %410 = dma.vmem_to_hbm [thread:$0]  %s408, 16, %s7, [#allocation4]
    $region33: #{tpu_custom_call.1} parent=1 // pred_fallthru
      _
    // Predicated region
    $region34: #{tpu_custom_call.1} parent=1 // pred_check
      _
    $region35: #{tpu_custom_call.1} parent=1 // pred_check_branch
      %412 = sbr.rel (0) target = $region37
    $region36: #{tpu_custom_call.1} parent=1 // pred_region
      %413 = dma.done [#allocation4], 16
    $region37: #{tpu_custom_call.1} parent=1 // pred_fallthru
      _
    %414 = vsyncpa [#allocation4], 1

// kernel: tpu_custom_call.1
$region0: #{tpu_custom_call.1}
  #allocation0 [shape = 'u32[]', space=smem, size = 0x4, offset = 0x4, fixed_abs, tag = 'smem constant byte address 0x4 - core index']
  #allocation1 [shape = 'u32[144,128]{1,0:T(1,128)}', space=vmem, size = 0x12000, scoped, tag = 'internal scratch']
  #allocation2 [shape = 'f32[1,1]{1,0:T(1,128)S(1)}', space=vmem, size = 0x200, scoped, tag = 'scoped memory for tpu_custom_call.1']
  %s0 = inlined_call_operand.vmem [shape: f32[128,32], index: 0, kind: input, shape index: {}]
  %s1 = inlined_call_operand.vmem [shape: f32[32,32], index: 1, kind: input, shape index: {}]
  %s2 = inlined_call_operand.vmem [shape: f32[32,1], index: 2, kind: input, shape index: {}]
  %s3 = inlined_call_operand.vmem [shape: f32[32,32], index: 3, kind: input, shape index: {}]
  %s4 = inlined_call_operand.vmem [shape: f32[32,1], index: 4, kind: input, shape index: {}]
  %s5 = inlined_call_operand.vmem [shape: f32[32,1], index: 5, kind: input, shape index: {}]
  %s6 = inlined_call_operand.<no memory space> [shape: f32[1,1], index: 6, kind: input, shape index: {}]
  %s7 = inlined_call_operand.hbm [shape: f32[1,128], index: 7, kind: output, shape index: {}]
  %s8 = sld [smem:[#allocation0]]
  $region38: #{tpu_custom_call.1} parent=0
    _
  %s10 = ssub.s32 1, %s8
  %s11 = scalar_select 0, %s10, %s8
  %v12 = vstv %s6
  %13 = vst [vmem:[#allocation2] sm:$0x1] %v12
  $region1: #{tpu_custom_call.1} parent=0
    #allocation3 [shape = 'u8[512]{0}', space=vmem, size = 0x400, scoped, tag = 'output window, operand 0, single buffered']
    #allocation4 [shape = 's32[1]{0}', space=sflag, size = 0x4, scoped, tag = 'scoped memory for tpu_custom_call.1']
    %14 = vsyncpa [#allocation4], 0
    // Predicated region
    $region2: #{tpu_custom_call.1} parent=1 // pred_check
      _
    $region3: #{tpu_custom_call.1} parent=1 // pred_check_branch
      %16 = sbr.rel (0) target = $region5
    $region4: #{tpu_custom_call.1} parent=1 // pred_region
      _
    $region5: #{tpu_custom_call.1} parent=1 // pred_fallthru
      _
    // Predicated region
    $region6: #{tpu_custom_call.1} parent=1 // pred_check
      _
    $region7: #{tpu_custom_call.1} parent=1 // pred_check_branch
      %18 = sbr.rel (0) target = $region9
    $region8: #{tpu_custom_call.1} parent=1 // pred_region
      _
    $region9: #{tpu_custom_call.1} parent=1 // pred_fallthru
      _
    // Predicated region
    $region10: #{tpu_custom_call.1} parent=1 // pred_check
      _
    $region11: #{tpu_custom_call.1} parent=1 // pred_check_branch
      %20 = sbr.rel (0) target = $region13
    $region12: #{tpu_custom_call.1} parent=1 // pred_region
      _
    $region13: #{tpu_custom_call.1} parent=1 // pred_fallthru
      _
    // Predicated region
    $region14: #{tpu_custom_call.1} parent=1 // pred_check
      _
    $region15: #{tpu_custom_call.1} parent=1 // pred_check_branch
      %22 = sbr.rel (0) target = $region17
    $region16: #{tpu_custom_call.1} parent=1 // pred_region
      _
    $region17: #{tpu_custom_call.1} parent=1 // pred_fallthru
      _
    // Predicated region
    $region18: #{tpu_custom_call.1} parent=1 // pred_check
      _
    $region19: #{tpu_custom_call.1} parent=1 // pred_check_branch
      %24 = sbr.rel (0) target = $region21
    $region20: #{tpu_custom_call.1} parent=1 // pred_region
      _
    $region21: #{tpu_custom_call.1} parent=1 // pred_fallthru
      _
    // Predicated region
    $region22: #{tpu_custom_call.1} parent=1 // pred_check
      _
    $region23: #{tpu_custom_call.1} parent=1 // pred_check_branch
      %26 = sbr.rel (0) target = $region25
    $region24: #{tpu_custom_call.1} parent=1 // pred_region
      _
    $region25: #{tpu_custom_call.1} parent=1 // pred_fallthru
      _
    // Predicated region
    $region26: #{tpu_custom_call.1} parent=1 // pred_check
      _
    $region27: #{tpu_custom_call.1} parent=1 // pred_check_branch
      %28 = sbr.rel (0) target = $region29
    $region28: #{tpu_custom_call.1} parent=1 // pred_region
      _
    $region29: #{tpu_custom_call.1} parent=1 // pred_fallthru
      _
    %v29 = vld [vmem:[%s0] sm:$0xff]
    %v30 = vld [vmem:[%s0 + $0x8] sm:$0xff]
    %v31 = vld [vmem:[%s0 + $0x10] sm:$0xff]
    %v32 = vld [vmem:[%s0 + $0x18] sm:$0xff]
    %v33 = vld [vmem:[%s0 + $0x20] sm:$0xff]
    %v34 = vld [vmem:[%s0 + $0x28] sm:$0xff]
    %v35 = vld [vmem:[%s0 + $0x30] sm:$0xff]
    %v36 = vld [vmem:[%s0 + $0x38] sm:$0xff]
    %v37 = vld [vmem:[%s0 + $0x40] sm:$0xff]
    %v38 = vld [vmem:[%s0 + $0x48] sm:$0xff]
    %v39 = vld [vmem:[%s0 + $0x50] sm:$0xff]
    %v40 = vld [vmem:[%s0 + $0x58] sm:$0xff]
    %v41 = vld [vmem:[%s0 + $0x60] sm:$0xff]
    %v42 = vld [vmem:[%s0 + $0x68] sm:$0xff]
    %v43 = vld [vmem:[%s0 + $0x70] sm:$0xff]
    %v44 = vld [vmem:[%s0 + $0x78] sm:$0xff]
    %v45 = vld [vmem:[%s1] sm:$0xff]
    %v46 = vld [vmem:[%s1 + $0x8] sm:$0xff]
    %v47 = vld [vmem:[%s1 + $0x10] sm:$0xff]
    %v48 = vld [vmem:[%s1 + $0x18] sm:$0xff]
    %v49 = vld [vmem:[%s2] sm:$0xff]
    %v50 = vld [vmem:[%s2 + $0x8] sm:$0xff]
    %v51 = vld [vmem:[%s2 + $0x10] sm:$0xff]
    %v52 = vld [vmem:[%s2 + $0x18] sm:$0xff]
    %54 = vset.pattern.permute.xlu0 0
    %55 = vperm.xlu0 %54, %v49
    %v56 = vpop.permute.xlu0 %55
    %59 = vset.pattern.permute.xlu0 0
    %60 = vperm.xlu0 %59, %v50
    %v61 = vpop.permute.xlu0 %60
    %64 = vset.pattern.permute.xlu0 0
    %65 = vperm.xlu0 %64, %v51
    %v66 = vpop.permute.xlu0 %65
    %69 = vset.pattern.permute.xlu0 0
    %70 = vperm.xlu0 %69, %v52
    %v71 = vpop.permute.xlu0 %70
    %vm73 = vcmask 261120
    %v75 = vsel %vm73, %v45, 0
    %v78 = vsel %vm73, %v46, 0
    %v81 = vsel %vm73, %v47, 0
    %v84 = vsel %vm73, %v48, 0
    %v87 = vsel %vm73, %v29, 0
    %v90 = vsel %vm73, %v30, 0
    %v93 = vsel %vm73, %v31, 0
    %v96 = vsel %vm73, %v32, 0
    %v99 = vsel %vm73, %v33, 0
    %v102 = vsel %vm73, %v34, 0
    %v105 = vsel %vm73, %v35, 0
    %v108 = vsel %vm73, %v36, 0
    %v111 = vsel %vm73, %v37, 0
    %v114 = vsel %vm73, %v38, 0
    %v117 = vsel %vm73, %v39, 0
    %v120 = vsel %vm73, %v40, 0
    %v123 = vsel %vm73, %v41, 0
    %v126 = vsel %vm73, %v42, 0
    %v129 = vsel %vm73, %v43, 0
    %v132 = vsel %vm73, %v44, 0
    %134 = vmatprep.subr.mxu0 0.0
    %135 = vmatpush1.xpose.msra.mxu0 %v132
    %136 = vmatprep.subr.mxu0 0.0
    %137 = vmatpush1.xpose.msra.mxu0 %v129
    %138 = vmatprep.subr.mxu0 0.0
    %139 = vmatpush1.xpose.msra.mxu0 %v126
    %140 = vmatprep.subr.mxu0 0.0
    %141 = vmatpush1.xpose.msra.mxu0 %v123
    %142 = vmatprep.subr.mxu0 0.0
    %143 = vmatpush1.xpose.msra.mxu0 %v120
    %144 = vmatprep.subr.mxu0 0.0
    %145 = vmatpush1.xpose.msra.mxu0 %v117
    %146 = vmatprep.subr.mxu0 0.0
    %147 = vmatpush1.xpose.msra.mxu0 %v114
    %148 = vmatprep.subr.mxu0 0.0
    %149 = vmatpush1.xpose.msra.mxu0 %v111
    %150 = vmatprep.subr.mxu0 0.0
    %151 = vmatpush1.xpose.msra.mxu0 %v108
    %152 = vmatprep.subr.mxu0 0.0
    %153 = vmatpush1.xpose.msra.mxu0 %v105
    %154 = vmatprep.subr.mxu0 0.0
    %155 = vmatpush1.xpose.msra.mxu0 %v102
    %156 = vmatprep.subr.mxu0 0.0
    %157 = vmatpush1.xpose.msra.mxu0 %v99
    %158 = vmatprep.subr.mxu0 0.0
    %159 = vmatpush1.xpose.msra.mxu0 %v96
    %160 = vmatprep.subr.mxu0 0.0
    %161 = vmatpush1.xpose.msra.mxu0 %v93
    %162 = vmatprep.subr.mxu0 0.0
    %163 = vmatpush1.xpose.msra.mxu0 %v90
    %164 = vmatprep.subr.mxu0 0.0
    %165 = vmatpush1.xpose.msra.mxu0 %v87
    %166 = vmatprep.subr.mxu0 0.0
    %167 = vmatpush2.xpose.msra.mxu0 0.0
    %168 = vmatprep.subr.mxu0 0.0
    %169 = vmatpush2.xpose.msra.mxu0 0.0
    %170 = vmatprep.subr.mxu0 0.0
    %171 = vmatpush2.xpose.msra.mxu0 0.0
    %172 = vmatprep.subr.mxu0 0.0
    %173 = vmatpush2.xpose.msra.mxu0 0.0
    %174 = vmatprep.subr.mxu0 0.0
    %175 = vmatpush2.xpose.msra.mxu0 0.0
    %176 = vmatprep.subr.mxu0 0.0
    %177 = vmatpush2.xpose.msra.mxu0 0.0
    %178 = vmatprep.subr.mxu0 0.0
    %179 = vmatpush2.xpose.msra.mxu0 0.0
    %180 = vmatprep.subr.mxu0 0.0
    %181 = vmatpush2.xpose.msra.mxu0 0.0
    %182 = vmatprep.subr.mxu0 0.0
    %183 = vmatpush2.xpose.msra.mxu0 0.0
    %184 = vmatprep.subr.mxu0 0.0
    %185 = vmatpush2.xpose.msra.mxu0 0.0
    %186 = vmatprep.subr.mxu0 0.0
    %187 = vmatpush2.xpose.msra.mxu0 0.0
    %188 = vmatprep.subr.mxu0 0.0
    %189 = vmatpush2.xpose.msra.mxu0 0.0
    %190 = vmatprep.subr.mxu0 0.0
    %191 = vmatpush2.xpose.msra.mxu0 0.0
    %192 = vmatprep.subr.mxu0 0.0
    %193 = vmatpush2.xpose.msra.mxu0 0.0
    %194 = vmatprep.subr.mxu0 0.0
    %195 = vmatpush2.xpose.msra.mxu0 0.0
    %196 = vmatprep.subr.mxu0 0.0
    %197 = vmatpush2.xpose.msra.mxu0 0.0
    %198 = vmatprep.mubr.f32.mxu0 0.0
    %199 = vmatmul.mubr.f32.gmra.mxu0 %v75
    %v200 = vpop.f32.mrf.mxu0
    %v201 = vadd.f32 %v56, %v200
    %v202 = vpop.f32.mrf.mxu0
    %203 = vmatprep.mubr.f32.mxu0 0.0
    %204 = vmatmul.mubr.f32.gmra.mxu0 %v78
    %v205 = vpop.f32.mrf.mxu0
    %v206 = vadd.f32 %v61, %v205
    %v207 = vpop.f32.mrf.mxu0
    %208 = vmatprep.mubr.f32.mxu0 0.0
    %209 = vmatmul.mubr.f32.gmra.mxu0 %v81
    %v210 = vpop.f32.mrf.mxu0
    %v211 = vadd.f32 %v66, %v210
    %v212 = vpop.f32.mrf.mxu0
    %213 = vmatprep.mubr.f32.mxu0 0.0
    %214 = vmatmul.mubr.f32.gmra.mxu0 %v84
    %v215 = vpop.f32.mrf.mxu0
    %v216 = vadd.f32 %v71, %v215
    %v217 = vpop.f32.mrf.mxu0
    %218 = vdwg.mxu0
    %v219 = vtanh.pop %v201
    %v220 = vtanh.pop %v206
    %v221 = vtanh.pop %v211
    %v222 = vtanh.pop %v216
    %v223 = vld [vmem:[%s3] sm:$0xff]
    %v224 = vld [vmem:[%s3 + $0x8] sm:$0xff]
    %v225 = vld [vmem:[%s3 + $0x10] sm:$0xff]
    %v226 = vld [vmem:[%s3 + $0x18] sm:$0xff]
    %v227 = vld [vmem:[%s4] sm:$0xff]
    %v228 = vld [vmem:[%s4 + $0x8] sm:$0xff]
    %v229 = vld [vmem:[%s4 + $0x10] sm:$0xff]
    %v230 = vld [vmem:[%s4 + $0x18] sm:$0xff]
    %232 = vset.pattern.permute.xlu0 0
    %233 = vperm.xlu0 %232, %v227
    %v234 = vpop.permute.xlu0 %233
    %237 = vset.pattern.permute.xlu0 0
    %238 = vperm.xlu0 %237, %v228
    %v239 = vpop.permute.xlu0 %238
    %242 = vset.pattern.permute.xlu0 0
    %243 = vperm.xlu0 %242, %v229
    %v244 = vpop.permute.xlu0 %243
    %247 = vset.pattern.permute.xlu0 0
    %248 = vperm.xlu0 %247, %v230
    %v249 = vpop.permute.xlu0 %248
    %v252 = vsel %vm73, %v223, 0
    %v255 = vsel %vm73, %v224, 0
    %v258 = vsel %vm73, %v225, 0
    %v261 = vsel %vm73, %v226, 0
    %263 = vmatprep.subr.mxu0 0.0
    %264 = vmatpush1.msra.mxu0 0.0
    %265 = vmatprep.subr.mxu0 0.0
    %266 = vmatpush1.msra.mxu0 0.0
    %267 = vmatprep.subr.mxu0 0.0
    %268 = vmatpush1.msra.mxu0 0.0
    %269 = vmatprep.subr.mxu0 0.0
    %270 = vmatpush1.msra.mxu0 0.0
    %271 = vmatprep.subr.mxu0 0.0
    %272 = vmatpush1.msra.mxu0 0.0
    %273 = vmatprep.subr.mxu0 0.0
    %274 = vmatpush1.msra.mxu0 0.0
    %275 = vmatprep.subr.mxu0 0.0
    %276 = vmatpush1.msra.mxu0 0.0
    %277 = vmatprep.subr.mxu0 0.0
    %278 = vmatpush1.msra.mxu0 0.0
    %279 = vmatprep.subr.mxu0 0.0
    %280 = vmatpush1.msra.mxu0 0.0
    %281 = vmatprep.subr.mxu0 0.0
    %282 = vmatpush1.msra.mxu0 0.0
    %283 = vmatprep.subr.mxu0 0.0
    %284 = vmatpush1.msra.mxu0 0.0
    %285 = vmatprep.subr.mxu0 0.0
    %286 = vmatpush1.msra.mxu0 0.0
    %287 = vmatprep.subr.mxu0 0.0
    %288 = vmatpush1.msra.mxu0 %v222
    %289 = vmatprep.subr.mxu0 0.0
    %290 = vmatpush1.msra.mxu0 %v221
    %291 = vmatprep.subr.mxu0 0.0
    %292 = vmatpush1.msra.mxu0 %v220
    %293 = vmatprep.subr.mxu0 0.0
    %294 = vmatpush1.msra.mxu0 %v219
    %295 = vmatprep.subr.mxu0 0.0
    %296 = vmatpush2.msra.mxu0 0.0
    %297 = vmatprep.subr.mxu0 0.0
    %298 = vmatpush2.msra.mxu0 0.0
    %299 = vmatprep.subr.mxu0 0.0
    %300 = vmatpush2.msra.mxu0 0.0
    %301 = vmatprep.subr.mxu0 0.0
    %302 = vmatpush2.msra.mxu0 0.0
    %303 = vmatprep.subr.mxu0 0.0
    %304 = vmatpush2.msra.mxu0 0.0
    %305 = vmatprep.subr.mxu0 0.0
    %306 = vmatpush2.msra.mxu0 0.0
    %307 = vmatprep.subr.mxu0 0.0
    %308 = vmatpush2.msra.mxu0 0.0
    %309 = vmatprep.subr.mxu0 0.0
    %310 = vmatpush2.msra.mxu0 0.0
    %311 = vmatprep.subr.mxu0 0.0
    %312 = vmatpush2.msra.mxu0 0.0
    %313 = vmatprep.subr.mxu0 0.0
    %314 = vmatpush2.msra.mxu0 0.0
    %315 = vmatprep.subr.mxu0 0.0
    %316 = vmatpush2.msra.mxu0 0.0
    %317 = vmatprep.subr.mxu0 0.0
    %318 = vmatpush2.msra.mxu0 0.0
    %319 = vmatprep.subr.mxu0 0.0
    %320 = vmatpush2.msra.mxu0 0.0
    %321 = vmatprep.subr.mxu0 0.0
    %322 = vmatpush2.msra.mxu0 0.0
    %323 = vmatprep.subr.mxu0 0.0
    %324 = vmatpush2.msra.mxu0 0.0
    %325 = vmatprep.subr.mxu0 0.0
    %326 = vmatpush2.msra.mxu0 0.0
    %327 = vmatprep.mubr.f32.mxu0 0.0
    %328 = vmatmul.mubr.f32.gmra.mxu0 %v252
    %v329 = vpop.f32.mrf.mxu0
    %v330 = vadd.f32 %v234, %v329
    %v331 = vpop.f32.mrf.mxu0
    %332 = vmatprep.mubr.f32.mxu0 0.0
    %333 = vmatmul.mubr.f32.gmra.mxu0 %v255
    %v334 = vpop.f32.mrf.mxu0
    %v335 = vadd.f32 %v239, %v334
    %v336 = vpop.f32.mrf.mxu0
    %337 = vmatprep.mubr.f32.mxu0 0.0
    %338 = vmatmul.mubr.f32.gmra.mxu0 %v258
    %v339 = vpop.f32.mrf.mxu0
    %v340 = vadd.f32 %v244, %v339
    %v341 = vpop.f32.mrf.mxu0
    %342 = vmatprep.mubr.f32.mxu0 0.0
    %343 = vmatmul.mubr.f32.gmra.mxu0 %v261
    %v344 = vpop.f32.mrf.mxu0
    %v345 = vadd.f32 %v249, %v344
    %v346 = vpop.f32.mrf.mxu0
    %347 = vdwg.mxu0
    %v348 = vtanh.pop %v330
    %v349 = vtanh.pop %v335
    %v350 = vtanh.pop %v340
    %v351 = vtanh.pop %v345
    %v352 = vld [vmem:[%s5] sm:$0xff]
    %v353 = vld [vmem:[%s5 + $0x8] sm:$0xff]
    %v354 = vld [vmem:[%s5 + $0x10] sm:$0xff]
    %v355 = vld [vmem:[%s5 + $0x18] sm:$0xff]
    %357 = vset.pattern.permute.xlu0 0
    %358 = vperm.xlu0 %357, %v352
    %v359 = vpop.permute.xlu0 %358
    %362 = vset.pattern.permute.xlu0 0
    %363 = vperm.xlu0 %362, %v353
    %v364 = vpop.permute.xlu0 %363
    %367 = vset.pattern.permute.xlu0 0
    %368 = vperm.xlu0 %367, %v354
    %v369 = vpop.permute.xlu0 %368
    %372 = vset.pattern.permute.xlu0 0
    %373 = vperm.xlu0 %372, %v355
    %v374 = vpop.permute.xlu0 %373
    %v376 = vmul.f32 %v348, %v359
    %v377 = vmul.f32 %v349, %v364
    %v378 = vmul.f32 %v350, %v369
    %v379 = vmul.f32 %v351, %v374
    %v380 = vadd.f32 %v376, %v377
    %v381 = vadd.f32 %v380, %v378
    %v382 = vadd.f32 %v381, %v379
    %v383 = vrot.slane %v382, 4
    %v384 = vadd.f32 %v382, %v383
    %v385 = vrot.slane %v384, 2
    %v386 = vadd.f32 %v384, %v385
    %v387 = vrot.slane %v386, 1
    %v388 = vadd.f32 %v386, %v387
    %v389 = vld [vmem:[#allocation2] sm:$0x1]
    %391 = vset.pattern.permute.xlu0 0
    %392 = vperm.xlu0 %391, %v389
    %v393 = vpop.permute.xlu0 %392
    %v395 = vlaneseq
    %v396 = vshrl.u32 %v395, 7
    %v397 = vsub.s32 0, %v396
    %v398 = vrot.slane %v393, %v397
    %v399 = vadd.f32 %v388, %v398
    %400 = vst [vmem:[#allocation3] sm:$0x1] %v399
    // Predicated region
    $region30: #{tpu_custom_call.1} parent=1 // pred_check
      _
    $region31: #{tpu_custom_call.1} parent=1 // pred_check_branch
      %402 = sbr.rel (0) target = $region33
    $region32: #{tpu_custom_call.1} parent=1 // pred_region
      %s404 = ssub.s32 16, 16
      %405 = vsyncadd [#allocation4], %s404
      %s407 = sshll.u32 [#allocation3], 4
      %s408 = int_to_ptr.vmem [resolvable:$true] %s407
      %410 = dma.vmem_to_hbm [thread:$0]  %s408, 16, %s7, [#allocation4]
    $region33: #{tpu_custom_call.1} parent=1 // pred_fallthru
      _
    // Predicated region
    $region34: #{tpu_custom_call.1} parent=1 // pred_check
      _
    $region35: #{tpu_custom_call.1} parent=1 // pred_check_branch
      %412 = sbr.rel (0) target = $region37
    $region36: #{tpu_custom_call.1} parent=1 // pred_region
      %413 = dma.done [#allocation4], 16
    $region37: #{tpu_custom_call.1} parent=1 // pred_fallthru
      _
    %414 = vsyncpa [#allocation4], 1

</llo_original>
